<compile_context>
chip_gen: v7x
topology: tpu7x:2x2x1
jax: 0.10.0
libtpu: 0.0.40
codegen_flags: <defaults>
</compile_context>

<pallas_src>
import functools

import jax
import jax.numpy as jnp
from jax.experimental import pallas as pl
from jax.experimental.pallas import tpu as pltpu


def _round_up(x, m):
    return ((x + m - 1) // m) * m


def dqn_kernel(x_ref, w1_ref, b1_ref, w2_ref, b2_ref, o_ref):
    # hidden = relu(x @ W1 + b1); dropout == identity in eval mode.
    xb = x_ref[...].astype(w1_ref.dtype)                       # VPU cast, MXU eats bf16
    h = jnp.dot(xb, w1_ref[...], preferred_element_type=jnp.float32)
    h = jnp.maximum(h + b1_ref[...], 0.0)                      # bias broadcast (1,HID)->(TILE_B,HID)
    # out = hidden @ W2 + b2; second dropout == identity in eval mode.
    out = jnp.dot(h.astype(w2_ref.dtype), w2_ref[...],
                  preferred_element_type=jnp.float32)
    o_ref[...] = (out + b2_ref[...]).astype(o_ref.dtype)       # final store in bf16


def prepare_dqn_params(w1, b1, w2, b2):
    """Pad (lane-dense 128 multiples) and cast the parameters ONCE, outside the
    hot path.  w1: (in_dim, hid); b1: (1, hid) or (hid,); w2: (hid, out_dim);
    b2: (1, out_dim) or (out_dim,)."""
    in_dim, hid = w1.shape
    out_dim = w2.shape[1]
    HID_P = _round_up(hid, 128)
    OUT_P = _round_up(out_dim, 128)
    bf16 = jnp.bfloat16
    w1p = jnp.zeros((in_dim, HID_P), bf16).at[:, :hid].set(w1.astype(bf16))
    b1p = jnp.zeros((1, HID_P), jnp.float32).at[:, :hid].set(
        jnp.reshape(b1, (1, hid)).astype(jnp.float32))
    w2p = jnp.zeros((HID_P, OUT_P), bf16).at[:hid, :out_dim].set(w2.astype(bf16))
    b2p = jnp.zeros((1, OUT_P), jnp.float32).at[:, :out_dim].set(
        jnp.reshape(b2, (1, out_dim)).astype(jnp.float32))
    return w1p, b1p, w2p, b2p


@functools.partial(jax.jit, static_argnames=("out_dim", "tile_b"))
def dqn_forward(x, w1p, b1p, w2p, b2p, *, out_dim, tile_b=1024):
    """x: (B, in_dim) unpadded; w1p/b1p/w2p/b2p from prepare_dqn_params().
    Returns (B, out_dim) in x.dtype."""
    B, in_dim = x.shape
    HID_P = w1p.shape[1]
    OUT_P = w2p.shape[1]
    x_item = x.dtype.itemsize

    def vmem_footprint(tb):
        x_tiles = 2 * tb * _round_up(in_dim, 128) * x_item     # double-buffered x tile
        o_tiles = 2 * tb * OUT_P * 2                            # double-buffered bf16 out tile
        weights = (_round_up(in_dim, 16) * HID_P + HID_P * OUT_P) * 2
        biases = 8 * (HID_P + OUT_P) * 4
        interm = tb * (HID_P + OUT_P) * 4                        # f32 h / pre-cast temporaries
        return x_tiles + o_tiles + weights + biases + interm

    # bf16 packs two rows per sublane -> native batch tile granularity is 16.
    B_P = _round_up(B, 16)
    TILE_B = min(tile_b, B_P)
    # v7x megacore: make sure the (parallel) grid has >= 2 steps when batch allows.
    if TILE_B >= B_P and B_P >= 32:
        TILE_B = _round_up(B_P // 2, 16)
    # Keep the footprint well under v7x's 64 MiB per-TC VMEM (v5e/v6e have 128 MiB).
    while TILE_B > 16 and vmem_footprint(TILE_B) > (40 << 20):
        TILE_B = max(16, _round_up(TILE_B // 2, 16))
    B_P = _round_up(B, TILE_B)
    n_tiles = B_P // TILE_B

    # Only copy x if the batch needs padding to a tile multiple (feature dim untouched).
    xp = x if B_P == B else jnp.pad(x, ((0, B_P - B), (0, 0)))

    flops = 2 * B_P * (in_dim * HID_P + HID_P * OUT_P)
    bytes_accessed = (xp.size * x_item + w1p.size * 2 + w2p.size * 2
                      + b1p.size * 4 + b2p.size * 4 + B_P * OUT_P * 2)
    vmem_limit = min(max(vmem_footprint(TILE_B) + (8 << 20), 16 << 20), 48 << 20)

    out_padded = pl.pallas_call(
        dqn_kernel,
        out_shape=jax.ShapeDtypeStruct((B_P, OUT_P), jnp.bfloat16),
        grid_spec=pltpu.PrefetchScalarGridSpec(
            num_scalar_prefetch=0,
            grid=(n_tiles,),
            in_specs=[
                pl.BlockSpec((TILE_B, in_dim), lambda i: (i, 0)),  # x tile (pipelined, unpadded feat dim)
                pl.BlockSpec((in_dim, HID_P), lambda i: (0, 0)),   # W1 (VMEM-resident)
                pl.BlockSpec((1, HID_P), lambda i: (0, 0)),        # b1 (resident)
                pl.BlockSpec((HID_P, OUT_P), lambda i: (0, 0)),    # W2 (resident)
                pl.BlockSpec((1, OUT_P), lambda i: (0, 0)),        # b2 (resident)
            ],
            out_specs=pl.BlockSpec((TILE_B, OUT_P), lambda i: (i, 0)),
        ),
        compiler_params=pltpu.CompilerParams(
            dimension_semantics=("parallel",),
            vmem_limit_bytes=vmem_limit,
        ),
        cost_estimate=pl.CostEstimate(
            flops=flops, transcendentals=0, bytes_accessed=bytes_accessed),
    )(xp, w1p, b1p, w2p, b2p)

    return out_padded[:B, :out_dim].astype(x.dtype)


def init_linear(key, fan_in, fan_out, dtype=jnp.float32):
    """PyTorch nn.Linear default init: U(-1/sqrt(fan_in), 1/sqrt(fan_in)).
    Weight returned pre-transposed to (fan_in, fan_out), bias as (1, fan_out)."""
    kw, kb = jax.random.split(key)
    bound = 1.0 / jnp.sqrt(jnp.asarray(fan_in, dtype))
    w = jax.random.uniform(kw, (fan_in, fan_out), dtype, -bound, bound)
    b = jax.random.uniform(kb, (1, fan_out), dtype, -bound, bound)
    return w, b


def reference_forward(x, w1, b1, w2, b2):
    h = jnp.maximum(x @ w1 + b1, 0.0)   # dropout = identity in eval mode
    return h @ w2 + b2


if __name__ == "__main__":
    key = jax.random.PRNGKey(0)
    k_x, k_l1, k_l2 = jax.random.split(key, 3)

    batch, input_dim, hidden_dim, output_dim = 8, 16, 32, 4

    x = jax.random.normal(k_x, (batch, input_dim), jnp.float32)
    w1, b1 = init_linear(k_l1, input_dim, hidden_dim)
    w2, b2 = init_linear(k_l2, hidden_dim, output_dim)

    # Pad / cast the parameters once, outside the hot path.
    w1p, b1p, w2p, b2p = prepare_dqn_params(w1, b1, w2, b2)

    out = dqn_forward(x, w1p, b1p, w2p, b2p, out_dim=output_dim)
    out = jax.block_until_ready(out)

    ref = reference_forward(x, w1, b1, w2, b2)
    assert out.shape == (batch, output_dim)
    # bf16 MXU inputs + bf16 output store with f32 accumulation -> loose tolerance.
    assert jnp.allclose(out, ref, atol=2e-2, rtol=2e-2), (
        jnp.max(jnp.abs(out - ref)))

    print("KERNEL_OK")
</pallas_src>

<mosaic_0001>
module attributes {stable_mosaic.version = 11 : i64} {
  func.func @dqn_kernel(%arg0: i32, %arg1: memref<16x16xf32, #tpu.memory_space<vmem>>, %arg2: memref<16x128xbf16, #tpu.memory_space<vmem>>, %arg3: memref<1x128xf32, #tpu.memory_space<vmem>>, %arg4: memref<128x128xbf16, #tpu.memory_space<vmem>>, %arg5: memref<1x128xf32, #tpu.memory_space<vmem>>, %arg6: memref<16x128xbf16, #tpu.memory_space<vmem>>) attributes {dimension_semantics = [#tpu.dimension_semantics<parallel>], iteration_bounds = array<i64: 1>, scalar_prefetch = 0 : i64, scratch_operands = 0 : i64, tpu.core_type = #tpu.core_type<tc>, window_params = [{transform_indices = @transform_0, window_bounds = array<i64: 16, 16>}, {pipeline_mode = #tpu.pipeline_mode<synchronous>, transform_indices = @transform_1, window_bounds = array<i64: 16, 128>}, {pipeline_mode = #tpu.pipeline_mode<synchronous>, transform_indices = @transform_2, window_bounds = array<i64: 1, 128>}, {pipeline_mode = #tpu.pipeline_mode<synchronous>, transform_indices = @transform_3, window_bounds = array<i64: 128, 128>}, {pipeline_mode = #tpu.pipeline_mode<synchronous>, transform_indices = @transform_4, window_bounds = array<i64: 1, 128>}, {transform_indices = @transform_5, window_bounds = array<i64: 16, 128>}]} {
    %c0 = arith.constant 0 : index
    %c0_0 = arith.constant 0 : index
    %0 = vector.load %arg1[%c0, %c0_0] : memref<16x16xf32, #tpu.memory_space<vmem>>, vector<16x16xf32>
    %1 = arith.truncf %0 : vector<16x16xf32> to vector<16x16xbf16>
    %c0_1 = arith.constant 0 : index
    %c0_2 = arith.constant 0 : index
    %2 = vector.load %arg2[%c0_1, %c0_2] : memref<16x128xbf16, #tpu.memory_space<vmem>>, vector<16x128xbf16>
    %cst = arith.constant dense<0.000000e+00> : vector<16x128xf32>
    %3 = tpu.matmul %1, %2, %cst {dimension_numbers = #tpu.dot_dimension_numbers<[1], [0], [0], [1], [0, 0, 1, 1], [], []>} : vector<16x16xbf16>, vector<16x128xbf16>, vector<16x128xf32> -> vector<16x128xf32>
    %c0_3 = arith.constant 0 : index
    %c0_4 = arith.constant 0 : index
    %4 = vector.load %arg3[%c0_3, %c0_4] : memref<1x128xf32, #tpu.memory_space<vmem>>, vector<1x128xf32>
    %5 = vector.broadcast %4 : vector<1x128xf32> to vector<16x128xf32>
    %6 = arith.addf %3, %5 : vector<16x128xf32>
    %cst_5 = arith.constant 0.000000e+00 : f32
    %7 = vector.broadcast %cst_5 : f32 to vector<16x128xf32>
    %8 = arith.maximumf %6, %7 : vector<16x128xf32>
    %9 = arith.truncf %8 : vector<16x128xf32> to vector<16x128xbf16>
    %c0_6 = arith.constant 0 : index
    %c0_7 = arith.constant 0 : index
    %10 = vector.load %arg4[%c0_6, %c0_7] : memref<128x128xbf16, #tpu.memory_space<vmem>>, vector<128x128xbf16>
    %cst_8 = arith.constant dense<0.000000e+00> : vector<16x128xf32>
    %11 = tpu.matmul %9, %10, %cst_8 {dimension_numbers = #tpu.dot_dimension_numbers<[1], [0], [0], [1], [0, 0, 1, 1], [], []>} : vector<16x128xbf16>, vector<128x128xbf16>, vector<16x128xf32> -> vector<16x128xf32>
    %c0_9 = arith.constant 0 : index
    %c0_10 = arith.constant 0 : index
    %12 = vector.load %arg5[%c0_9, %c0_10] : memref<1x128xf32, #tpu.memory_space<vmem>>, vector<1x128xf32>
    %13 = vector.broadcast %12 : vector<1x128xf32> to vector<16x128xf32>
    %14 = arith.addf %11, %13 : vector<16x128xf32>
    %15 = arith.truncf %14 : vector<16x128xf32> to vector<16x128xbf16>
    %c0_11 = arith.constant 0 : index
    %c0_12 = arith.constant 0 : index
    %16 = vector.load %arg6[%c0_11, %c0_12] : memref<16x128xbf16, #tpu.memory_space<vmem>>, vector<16x128xbf16>
    tpu.vector_store %arg6[%c0_11, %c0_12], %15 {strides = array<i32>} : memref<16x128xbf16, #tpu.memory_space<vmem>>, vector<16x128xbf16>,
    return
  }
  func.func @transform_0(%arg0: i32) -> (i32, i32) {
    %c0_i32 = arith.constant 0 : i32
    %c0_i32_0 = arith.constant 0 : i32
    return %arg0, %c0_i32 : i32, i32
  }
  func.func @transform_1(%arg0: i32) -> (i32, i32) {
    %c0_i32 = arith.constant 0 : i32
    %c0_i32_0 = arith.constant 0 : i32
    %c0_i32_1 = arith.constant 0 : i32
    return %c0_i32, %c0_i32_0 : i32, i32
  }
  func.func @transform_2(%arg0: i32) -> (i32, i32) {
    %c0_i32 = arith.constant 0 : i32
    %c0_i32_0 = arith.constant 0 : i32
    %c0_i32_1 = arith.constant 0 : i32
    return %c0_i32, %c0_i32_0 : i32, i32
  }
  func.func @transform_3(%arg0: i32) -> (i32, i32) {
    %c0_i32 = arith.constant 0 : i32
    %c0_i32_0 = arith.constant 0 : i32
    %c0_i32_1 = arith.constant 0 : i32
    return %c0_i32, %c0_i32_0 : i32, i32
  }
  func.func @transform_4(%arg0: i32) -> (i32, i32) {
    %c0_i32 = arith.constant 0 : i32
    %c0_i32_0 = arith.constant 0 : i32
    %c0_i32_1 = arith.constant 0 : i32
    return %c0_i32, %c0_i32_0 : i32, i32
  }
  func.func @transform_5(%arg0: i32) -> (i32, i32) {
    %c0_i32 = arith.constant 0 : i32
    %c0_i32_0 = arith.constant 0 : i32
    return %arg0, %c0_i32 : i32, i32
  }
}

</mosaic_0001>

<llo_original>
// kernel: dqn_forward.1
$region0: #{dqn_forward.1}
  #allocation0 [shape = 'u32[]', space=smem, size = 0x4, offset = 0x4, fixed_abs, tag = 'smem constant byte address 0x4 - core index']
  #allocation1 [shape = 'u32[144,128]{1,0:T(1,128)}', space=vmem, size = 0x12000, scoped, tag = 'internal scratch']
  %s0 = inlined_call_operand.vmem [shape: f32[16,16], index: 0, kind: input, shape index: {}]
  %s1 = inlined_call_operand.vmem [shape: bf16[16,128], index: 1, kind: input, shape index: {}]
  %s2 = inlined_call_operand.vmem [shape: f32[1,128], index: 2, kind: input, shape index: {}]
  %s3 = inlined_call_operand.hbm [shape: bf16[128,128], index: 3, kind: input, shape index: {}]
  %s4 = inlined_call_operand.vmem [shape: f32[1,128], index: 4, kind: input, shape index: {}]
  %s5 = inlined_call_operand.vmem [shape: bf16[16,128], index: 5, kind: output, shape index: {}]
  %s6 = sld [smem:[#allocation0]]
  $region34: #{dqn_forward.1} parent=0
    _
  %s8 = ssub.s32 1, %s6
  %s9 = scalar_select 0, %s8, %s6
  $region1: #{dqn_forward.1} parent=0
    #allocation2 [shape = 'u8[32768]{0}', space=vmem, size = 0x8000, scoped, tag = 'input window, operand 3, single buffered']
    #allocation3 [shape = 's32[1]{0}', space=sflag, size = 0x4, scoped, tag = 'scoped memory for dqn_forward.1']
    %10 = vsyncpa [#allocation3], 0
    // Predicated region
    $region2: #{dqn_forward.1} parent=1 // pred_check
      _
    $region3: #{dqn_forward.1} parent=1 // pred_check_branch
      %12 = sbr.rel (0) target = $region5
    $region4: #{dqn_forward.1} parent=1 // pred_region
      _
    $region5: #{dqn_forward.1} parent=1 // pred_fallthru
      _
    // Predicated region
    $region6: #{dqn_forward.1} parent=1 // pred_check
      _
    $region7: #{dqn_forward.1} parent=1 // pred_check_branch
      %14 = sbr.rel (0) target = $region9
    $region8: #{dqn_forward.1} parent=1 // pred_region
      _
    $region9: #{dqn_forward.1} parent=1 // pred_fallthru
      _
    // Predicated region
    $region10: #{dqn_forward.1} parent=1 // pred_check
      _
    $region11: #{dqn_forward.1} parent=1 // pred_check_branch
      %16 = sbr.rel (0) target = $region13
    $region12: #{dqn_forward.1} parent=1 // pred_region
      _
    $region13: #{dqn_forward.1} parent=1 // pred_fallthru
      _
    // Predicated region
    $region14: #{dqn_forward.1} parent=1 // pred_check
      _
    $region15: #{dqn_forward.1} parent=1 // pred_check_branch
      %18 = sbr.rel (0) target = $region17
    $region16: #{dqn_forward.1} parent=1 // pred_region
      %s20 = ssub.s32 1024, 1024
      %21 = vsyncadd [#allocation3], %s20
      %s22 = sshll.u32 [#allocation2], 4
      %s23 = int_to_ptr.vmem [resolvable:$true] %s22
      %28 = dma.hbm_to_vmem [thread:$0]  %s3, 1024, %s23, [#allocation3], 64, 64, 4
    $region17: #{dqn_forward.1} parent=1 // pred_fallthru
      _
    // Predicated region
    $region18: #{dqn_forward.1} parent=1 // pred_check
      _
    $region19: #{dqn_forward.1} parent=1 // pred_check_branch
      %30 = sbr.rel (0) target = $region21
    $region20: #{dqn_forward.1} parent=1 // pred_region
      _
    $region21: #{dqn_forward.1} parent=1 // pred_fallthru
      _
    // Predicated region
    $region22: #{dqn_forward.1} parent=1 // pred_check
      _
    $region23: #{dqn_forward.1} parent=1 // pred_check_branch
      %32 = sbr.rel (0) target = $region25
    $region24: #{dqn_forward.1} parent=1 // pred_region
      %33 = dma.done [#allocation3], 1024
    $region25: #{dqn_forward.1} parent=1 // pred_fallthru
      _
    %v35 = vld [vmem:[%s0] sm:$0xff]
    %v36 = vld [vmem:[%s0 + $0x8] sm:$0xff]
    %v37 = vpack.c.bf16 %v36, %v35
    %v38 = vld [vmem:[%s1] sm:$0xf]
    %v39 = vld [vmem:[%s1 + $0x4] sm:$0xf]
    %v40 = vld [vmem:[%s2] sm:$0x1]
    %v42 = vlaneseq
    %v43 = vshrl.u32 %v42, 7
    %v44 = vsub.s32 0, %v43
    %v45 = vrot.slane %v40, %v44
    %v49 = vunpack.c.l.b16 %v38
    %v50 = vunpack.c.l.b16 %v39
    %v51 = vpack.c.b16 %v50, %v49
    %vm53 = vcmask 130048
    %v55 = vsel %vm53, %v37, 0
    %57 = vmatprep.subr.bf16.mxu0 0
    %58 = vmatpush1.bf16.msra.mxu0 %v51
    %59 = vmatprep.subr.bf16.mxu0 0
    %60 = vmatpush1.bf16.msra.mxu0 0
    %61 = vmatprep.subr.bf16.mxu0 0
    %62 = vmatpush1.bf16.msra.mxu0 0
    %63 = vmatprep.subr.bf16.mxu0 0
    %64 = vmatpush1.bf16.msra.mxu0 0
    %65 = vmatprep.subr.bf16.mxu0 0
    %66 = vmatpush1.bf16.msra.mxu0 0
    %67 = vmatprep.subr.bf16.mxu0 0
    %68 = vmatpush1.bf16.msra.mxu0 0
    %69 = vmatprep.subr.bf16.mxu0 0
    %70 = vmatpush1.bf16.msra.mxu0 0
    %71 = vmatprep.subr.bf16.mxu0 0
    %72 = vmatpush1.bf16.msra.mxu0 0
    %73 = vmatprep.subr.bf16.mxu0 0
    %74 = vmatpush1.bf16.msra.mxu0 0
    %75 = vmatprep.subr.bf16.mxu0 0
    %76 = vmatpush1.bf16.msra.mxu0 0
    %77 = vmatprep.subr.bf16.mxu0 0
    %78 = vmatpush1.bf16.msra.mxu0 0
    %79 = vmatprep.subr.bf16.mxu0 0
    %80 = vmatpush1.bf16.msra.mxu0 0
    %81 = vmatprep.subr.bf16.mxu0 0
    %82 = vmatpush1.bf16.msra.mxu0 0
    %83 = vmatprep.subr.bf16.mxu0 0
    %84 = vmatpush1.bf16.msra.mxu0 0
    %85 = vmatprep.subr.bf16.mxu0 0
    %86 = vmatpush1.bf16.msra.mxu0 0
    %87 = vmatprep.subr.bf16.mxu0 0
    %88 = vmatpush1.bf16.msra.mxu0 0
    %89 = vmatprep.mubr.bf16.mxu0 0
    %90 = vmatmul.mubr.bf16.gmra.mrb[0].mxu0 %v55
    %v91 = vpop.f32.mrb[0].mxu0
    %v92 = vadd.f32 %v45, %v91
    %v93 = vpop.f32.mrb[0].mxu0
    %v94 = vpop.f32.mrb[0].mxu0
    %v95 = vadd.f32 %v45, %v94
    %v96 = vpop.f32.mrb[0].mxu0
    %97 = vdwg.mxu0
    %v98 = vmax.f32 %v92, 0.0
    %v99 = vmax.f32 %v95, 0.0
    %v100 = vpack.c.bf16 %v99, %v98
    %v101 = vld [vmem:[#allocation2] sm:$0xf]
    %v102 = vld [vmem:[#allocation2 + $0x4] sm:$0xf]
    %v103 = vld [vmem:[#allocation2 + $0x8] sm:$0xf]
    %v104 = vld [vmem:[#allocation2 + $0xc] sm:$0xf]
    %v105 = vld [vmem:[#allocation2 + $0x10] sm:$0xf]
    %v106 = vld [vmem:[#allocation2 + $0x14] sm:$0xf]
    %v107 = vld [vmem:[#allocation2 + $0x18] sm:$0xf]
    %v108 = vld [vmem:[#allocation2 + $0x1c] sm:$0xf]
    %v109 = vld [vmem:[#allocation2 + $0x20] sm:$0xf]
    %v110 = vld [vmem:[#allocation2 + $0x24] sm:$0xf]
    %v111 = vld [vmem:[#allocation2 + $0x28] sm:$0xf]
    %v112 = vld [vmem:[#allocation2 + $0x2c] sm:$0xf]
    %v113 = vld [vmem:[#allocation2 + $0x30] sm:$0xf]
    %v114 = vld [vmem:[#allocation2 + $0x34] sm:$0xf]
    %v115 = vld [vmem:[#allocation2 + $0x38] sm:$0xf]
    %v116 = vld [vmem:[#allocation2 + $0x3c] sm:$0xf]
    %v117 = vld [vmem:[%s4] sm:$0x1]
    %v119 = vlaneseq
    %v120 = vshrl.u32 %v119, 7
    %v121 = vsub.s32 0, %v120
    %v122 = vrot.slane %v117, %v121
    %v140 = vunpack.c.l.b16 %v101
    %v141 = vunpack.c.l.b16 %v102
    %v142 = vunpack.c.l.b16 %v103
    %v143 = vunpack.c.l.b16 %v104
    %v144 = vunpack.c.l.b16 %v105
    %v145 = vunpack.c.l.b16 %v106
    %v146 = vunpack.c.l.b16 %v107
    %v147 = vunpack.c.l.b16 %v108
    %v148 = vunpack.c.l.b16 %v109
    %v149 = vunpack.c.l.b16 %v110
    %v150 = vunpack.c.l.b16 %v111
    %v151 = vunpack.c.l.b16 %v112
    %v152 = vunpack.c.l.b16 %v113
    %v153 = vunpack.c.l.b16 %v114
    %v154 = vunpack.c.l.b16 %v115
    %v155 = vunpack.c.l.b16 %v116
    %v156 = vpack.c.b16 %v141, %v140
    %v157 = vpack.c.b16 %v143, %v142
    %v158 = vpack.c.b16 %v145, %v144
    %v159 = vpack.c.b16 %v147, %v146
    %v160 = vpack.c.b16 %v149, %v148
    %v161 = vpack.c.b16 %v151, %v150
    %v162 = vpack.c.b16 %v153, %v152
    %v163 = vpack.c.b16 %v155, %v154
    %172 = vmatprep.subr.bf16.mxu0 0
    %173 = vmatpush1.bf16.msra.mxu0 %v156
    %174 = vmatprep.subr.bf16.mxu0 0
    %175 = vmatpush1.bf16.msra.mxu0 %v157
    %176 = vmatprep.subr.bf16.mxu0 0
    %177 = vmatpush1.bf16.msra.mxu0 %v158
    %178 = vmatprep.subr.bf16.mxu0 0
    %179 = vmatpush1.bf16.msra.mxu0 %v159
    %180 = vmatprep.subr.bf16.mxu0 0
    %181 = vmatpush1.bf16.msra.mxu0 %v160
    %182 = vmatprep.subr.bf16.mxu0 0
    %183 = vmatpush1.bf16.msra.mxu0 %v161
    %184 = vmatprep.subr.bf16.mxu0 0
    %185 = vmatpush1.bf16.msra.mxu0 %v162
    %186 = vmatprep.subr.bf16.mxu0 0
    %187 = vmatpush1.bf16.msra.mxu0 %v163
    %188 = vmatprep.subr.bf16.mxu0 0
    %189 = vmatpush1.bf16.msra.mxu0 0
    %190 = vmatprep.subr.bf16.mxu0 0
    %191 = vmatpush1.bf16.msra.mxu0 0
    %192 = vmatprep.subr.bf16.mxu0 0
    %193 = vmatpush1.bf16.msra.mxu0 0
    %194 = vmatprep.subr.bf16.mxu0 0
    %195 = vmatpush1.bf16.msra.mxu0 0
    %196 = vmatprep.subr.bf16.mxu0 0
    %197 = vmatpush1.bf16.msra.mxu0 0
    %198 = vmatprep.subr.bf16.mxu0 0
    %199 = vmatpush1.bf16.msra.mxu0 0
    %200 = vmatprep.subr.bf16.mxu0 0
    %201 = vmatpush1.bf16.msra.mxu0 0
    %202 = vmatprep.subr.bf16.mxu0 0
    %203 = vmatpush1.bf16.msra.mxu0 0
    %204 = vmatprep.mubr.bf16.mxu0 0
    %205 = vmatmul.mubr.bf16.gmra.mrb[0].mxu0 %v100
    %v206 = vpop.f32.mrb[0].mxu0
    %v207 = vadd.f32 %v122, %v206
    %v208 = vpop.f32.mrb[0].mxu0
    %v209 = vpop.f32.mrb[0].mxu0
    %v210 = vadd.f32 %v122, %v209
    %v211 = vpop.f32.mrb[0].mxu0
    %212 = vdwg.mxu0
    %v213 = vpack.c.bf16 %v210, %v207
    %v215 = vunpack.c.l.b16 %v213
    %v216 = vunpack.c.h.b16 %v213
    %v217 = vpack.c.b16 %v215, %v215
    %v218 = vpack.c.b16 %v216, %v216
    %221 = vst [vmem:[%s5] sm:$0xf] %v217
    %222 = vst [vmem:[%s5 + $0x4] sm:$0xf] %v218
    // Predicated region
    $region26: #{dqn_forward.1} parent=1 // pred_check
      _
    $region27: #{dqn_forward.1} parent=1 // pred_check_branch
      %224 = sbr.rel (0) target = $region29
    $region28: #{dqn_forward.1} parent=1 // pred_region
      _
    $region29: #{dqn_forward.1} parent=1 // pred_fallthru
      _
    // Predicated region
    $region30: #{dqn_forward.1} parent=1 // pred_check
      _
    $region31: #{dqn_forward.1} parent=1 // pred_check_branch
      %226 = sbr.rel (0) target = $region33
    $region32: #{dqn_forward.1} parent=1 // pred_region
      _
    $region33: #{dqn_forward.1} parent=1 // pred_fallthru
      _
    %227 = vsyncpa [#allocation3], 1

</llo_original>
